<compile_context>
chip_gen: v6e
topology: v6e:2x2x1
jax: 0.10.0
libtpu: 0.0.40
codegen_flags: <defaults>
</compile_context>

<pallas_src>
import functools

import jax
import jax.numpy as jnp
import numpy as np
from jax.experimental import pallas as pl
from jax.experimental.pallas import tpu as pltpu

# ---------------------------------------------------------------------------
# Tunables
# ---------------------------------------------------------------------------
# Target total VMEM footprint per grid step (IO double buffers + f32 block
# temporaries + resident weights).  Kept comfortably under v7x's 64 MiB/TC.
_VMEM_TARGET_BYTES = 36 << 20
# Hard cap for vmem_limit_bytes and for the "does this fit at all" guard.
_VMEM_LIMIT_CAP_BYTES = 44 << 20
# kernel_size at which the roll/tap chain becomes XLU-bound (2 XLU units) and
# the MXU banded-matmul formulation wins: ~9 for f32, earlier for narrow dtypes.
_MXU_MIN_KERNEL_SIZE_F32 = 9
_MXU_MIN_KERNEL_SIZE_NARROW = 7
# Largest [L, L] f32 averaging matrix we are willing to keep resident in VMEM.
_MXU_MAX_WEIGHT_BYTES = 8 << 20
# Per-batch body is Python-unrolled up to this many batch rows (LLO scheduler
# visibility); beyond that it becomes a lax.fori_loop to bound trace size.
_MAX_UNROLLED_BATCH = 8


# ---------------------------------------------------------------------------
# Kernel bodies
# ---------------------------------------------------------------------------
def _for_each_batch(n, process):
    """Run `process(b)` for b in [0, n): unrolled for small n, fori_loop else."""
    if n <= _MAX_UNROLLED_BATCH:
        for b in range(n):
            process(b)
    else:
        def body(b, carry):
            process(b)
            return carry
        jax.lax.fori_loop(0, n, body, None)


def _taps_kernel(x_ref, res_ref, mean_ref, *, kernel_size: int):
    """Small-k path: roll + edge-select tap chain over a (Bt, L, Ct) block."""
    bt, L, ct = x_ref.shape
    pad = (kernel_size - 1) // 2
    inv_k = 1.0 / kernel_size

    # Time-index iota shared by every batch row and every tap (hoisted: JAX
    # does not CSE broadcast_in_dim, so per-tap rebuilds would replicate it).
    t = jax.lax.broadcasted_iota(jnp.int32, (L, ct), 0)

    def process(b):
        xf = x_ref[b].astype(jnp.float32)                 # [L, Ct]
        first = jnp.broadcast_to(xf[0:1, :], (L, ct))     # row 0 replicated
        last = jnp.broadcast_to(xf[L - 1:L, :], (L, ct))  # row L-1 replicated
        acc = xf                                          # o == 0 tap
        # Per-tap edge selects are kept: this path only runs for small k where
        # the kernel is HBM-bound, so the extra VPU selects are hidden.
        for o in range(1, pad + 1):
            # forward tap: y[t] = x[t+o]; rows t >= L-o replicate the last row.
            fwd = pltpu.roll(xf, shift=(L - o) % L, axis=0)
            fwd = jnp.where(t >= L - o, last, fwd)
            # backward tap: y[t] = x[t-o]; rows t < o replicate the first row.
            bwd = pltpu.roll(xf, shift=o % L, axis=0)
            bwd = jnp.where(t < o, first, bwd)
            acc = acc + fwd + bwd
        mean = acc * inv_k
        mean_ref[b] = mean.astype(mean_ref.dtype)
        res_ref[b] = (xf - mean).astype(res_ref.dtype)

    _for_each_batch(bt, process)


def _mxu_kernel(w_ref, x_ref, res_ref, mean_ref):
    """Large-k path: mean = W @ x with a replicate-padded averaging band matrix.

    W has a constant index_map, so it is DMA'd into VMEM once and reused by
    every grid step; the MXU (otherwise idle) replaces the whole XLU/VPU chain.
    """
    bt = x_ref.shape[0]
    w = w_ref[...]                                        # [L, L] f32

    def process(b):
        xf = x_ref[b].astype(jnp.float32)                 # [L, Ct]
        # Full-precision f32 matmul: HIGHEST keeps parity (<=1e-5) with the
        # PyTorch f32 AvgPool reference; default bf16 passes would not.
        mean = jnp.dot(w, xf, preferred_element_type=jnp.float32,
                       precision=jax.lax.Precision.HIGHEST)
        mean_ref[b] = mean.astype(mean_ref.dtype)
        res_ref[b] = (xf - mean).astype(res_ref.dtype)

    _for_each_batch(bt, process)


# ---------------------------------------------------------------------------
# Host-side helpers
# ---------------------------------------------------------------------------
@functools.lru_cache(maxsize=None)
def _avg_weights_np(L: int, kernel_size: int) -> np.ndarray:
    """[L, L] f32 matrix: W[t, s] = (#o in [-pad, pad] with clamp(t+o) == s)/k."""
    pad = (kernel_size - 1) // 2
    idx = np.arange(L)
    w = np.zeros((L, L), dtype=np.float32)
    for o in range(-pad, pad + 1):
        np.add.at(w, (idx, np.clip(idx + o, 0, L - 1)), 1.0)
    return w / np.float32(kernel_size)


def _vmem_bytes(bt: int, L: int, ct: int, itemsize: int, w_bytes: int) -> int:
    io_tile = bt * L * ct * itemsize
    slice_f32 = L * ct * 4
    # 1 input + 2 outputs, each double-buffered by the pipeline, plus ~6 live
    # f32 [L, Ct] temporaries in the per-batch body, plus the (conservatively
    # double-buffered) resident weight matrix.
    return 3 * 2 * io_tile + 6 * slice_f32 + 2 * w_bytes


def _largest_divisor_at_most(n: int, cap: int) -> int:
    cap = max(1, min(cap, n))
    for d in range(cap, 0, -1):
        if n % d == 0:
            return d
    return 1


def _pick_tiles(B: int, L: int, C: int, itemsize: int, w_bytes: int):
    """Pick (Bt, Ct) so the per-step VMEM footprint stays under the target."""
    def fp(bt, ct):
        return _vmem_bytes(bt, L, ct, itemsize, w_bytes)

    if C % 128 == 0:
        # Lane-dense channel tiles: largest 128-multiple divisor that fits.
        ct = 128
        cand = 256
        while cand <= C:
            if C % cand == 0 and fp(1, cand) <= _VMEM_TARGET_BYTES:
                ct = cand
            cand += 128
    else:
        # Non-128-multiple channel counts must be taken whole ((8,128) rule).
        # TODO(synk): lane-dense flattened [B, L*C] view for tiny C (see header).
        ct = C

    # Fold batches into the block to amortize the ~0.35 us per-grid-step cost.
    bt = 1
    for d in range(1, B + 1):
        if B % d == 0 and fp(d, ct) <= _VMEM_TARGET_BYTES:
            bt = d

    # Keep >= 2 grid steps when the data allows it so both v7x TensorCores get
    # work (harmless on single-TensorCore v5e/v6e).
    if B // bt == 1 and C // ct == 1:
        if B > 1:
            bt = _largest_divisor_at_most(B, B // 2)
        elif C % 128 == 0 and C >= 256:
            best = ct
            cand = 128
            while cand <= C // 2:
                if C % cand == 0:
                    best = cand
                cand += 128
            ct = best
    return bt, ct


# ---------------------------------------------------------------------------
# Public wrapper
# ---------------------------------------------------------------------------
def raw_series_decomp(x: jax.Array, kernel_size: int, stride: int = 1, *,
                      mode: str | None = None):
    """Returns (res, moving_mean), matching the PyTorch module's forward.

    Supports x of shape [B, L, C] (3-D path) or [L, C] (2-D path).
    `mode` in {None (auto), "taps", "mxu"}.
    """
    assert stride == 1, "raw_series_decomp only supports stride=1"
    assert kernel_size >= 1 and kernel_size % 2 == 1, (
        "kernel_size must be odd so output length matches input length")

    squeeze_batch = x.ndim == 2
    if squeeze_batch:
        x = x[None]                   # [1, L, C]
    if x.ndim != 3:
        raise ValueError(f"Unsupported data shape: {x.shape}")

    B, L, C = x.shape
    itemsize = x.dtype.itemsize

    if mode is None:
        k_min = (_MXU_MIN_KERNEL_SIZE_F32 if itemsize >= 4
                 else _MXU_MIN_KERNEL_SIZE_NARROW)
        mode = ("mxu" if (kernel_size >= k_min
                          and L * L * 4 <= _MXU_MAX_WEIGHT_BYTES)
                else "taps")
    assert mode in ("taps", "mxu"), f"unknown mode {mode!r}"

    w_bytes = L * L * 4 if mode == "mxu" else 0
    bt, ct = _pick_tiles(B, L, C, itemsize, w_bytes)

    est = _vmem_bytes(bt, L, ct, itemsize, w_bytes)
    if est > _VMEM_LIMIT_CAP_BYTES:
        # TODO(synk): tile the time axis with a (kernel_size-1)//2 halo for very
        # large L with a non-128-multiple C instead of failing.
        raise ValueError(
            f"series_decomp block ({bt},{L},{ct}) needs ~{est >> 20} MiB VMEM; "
            "reduce L/C or add time-axis halo tiling")
    vmem_limit = int(min(max(est + (8 << 20), 24 << 20), _VMEM_LIMIT_CAP_BYTES))

    grid = (B // bt, C // ct)
    block = (bt, L, ct)
    xmap = lambda i, j: (i, 0, j)
    data_spec = pl.BlockSpec(block, xmap)
    out_specs = [pl.BlockSpec(block, xmap), pl.BlockSpec(block, xmap)]
    out_shape = (jax.ShapeDtypeStruct((B, L, C), x.dtype),
                 jax.ShapeDtypeStruct((B, L, C), x.dtype))
    compiler_params = pltpu.CompilerParams(
        dimension_semantics=("parallel", "parallel"),
        vmem_limit_bytes=vmem_limit)

    if mode == "mxu":
        w = jnp.asarray(_avg_weights_np(L, kernel_size))
        grid_spec = pltpu.PrefetchScalarGridSpec(
            num_scalar_prefetch=0, grid=grid,
            in_specs=[pl.BlockSpec((L, L), lambda i, j: (0, 0)),  # resident W
                      data_spec],
            out_specs=out_specs)
        res, mean = pl.pallas_call(
            _mxu_kernel, out_shape=out_shape, grid_spec=grid_spec,
            compiler_params=compiler_params)(w, x)
    else:
        kernel = functools.partial(_taps_kernel, kernel_size=kernel_size)
        grid_spec = pltpu.PrefetchScalarGridSpec(
            num_scalar_prefetch=0, grid=grid,
            in_specs=[data_spec], out_specs=out_specs)
        res, mean = pl.pallas_call(
            kernel, out_shape=out_shape, grid_spec=grid_spec,
            compiler_params=compiler_params)(x)

    if squeeze_batch:
        res, mean = res[0], mean[0]
    return res, mean


# ---------------------------------------------------------------------------
# Reference + tests
# ---------------------------------------------------------------------------
def _reference(x: np.ndarray, kernel_size: int):
    """Pure-numpy reference mirroring the PyTorch forward (3-D path, f32)."""
    x = np.asarray(x).astype(np.float32)
    pad = (kernel_size - 1) // 2
    front = np.repeat(x[:, 0:1, :], pad, axis=1)
    end = np.repeat(x[:, -1:, :], pad, axis=1)
    xp = np.concatenate([front, x, end], axis=1)          # [B, L+2p, C]
    L = x.shape[1]
    mean = np.stack(
        [xp[:, t:t + kernel_size, :].mean(axis=1) for t in range(L)], axis=1)
    return x - mean, mean


def _check(x, kernel_size, rtol=1e-5, atol=1e-5, **kwargs):
    res, mean = raw_series_decomp(x, kernel_size, **kwargs)
    jax.block_until_ready((res, mean))
    xr = np.asarray(x).astype(np.float32)
    if xr.ndim == 2:
        r_ref, m_ref = _reference(xr[None], kernel_size)
        r_ref, m_ref = r_ref[0], m_ref[0]
    else:
        r_ref, m_ref = _reference(xr, kernel_size)
    np.testing.assert_allclose(np.asarray(mean).astype(np.float32), m_ref,
                               rtol=rtol, atol=atol)
    np.testing.assert_allclose(np.asarray(res).astype(np.float32), r_ref,
                               rtol=rtol, atol=atol)


if __name__ == "__main__":
    key = jax.random.PRNGKey(0)

    # 1) taps mode, small k, patch-style channels, batch folding (Bt=2).
    x1 = jax.random.normal(key, (4, 16, 8), dtype=jnp.float32)
    _check(x1, 5)

    # 2) taps mode, many batches folded into one block -> in-kernel fori_loop
    #    over the batch rows (Bt=16, grid=(2, 1)).
    key, sub = jax.random.split(key)
    x2 = jax.random.normal(sub, (32, 24, 8), dtype=jnp.float32)
    _check(x2, 3)

    # 3) MXU banded-matmul mode (k=25), lane-dense channel tiling (C=256).
    key, sub = jax.random.split(key)
    x3 = jax.random.normal(sub, (2, 32, 256), dtype=jnp.float32)
    _check(x3, 25)

    # 4) MXU mode with pad >= L (replicate clamping baked into the weights).
    key, sub = jax.random.split(key)
    x4 = jax.random.normal(sub, (2, 8, 8), dtype=jnp.float32)
    _check(x4, 21)

    # 5) 2-D path [series_len, n_vars].
    key, sub = jax.random.split(key)
    x5 = jax.random.normal(sub, (16, 4), dtype=jnp.float32)
    _check(x5, 3)

    # 6) bf16 inputs (dtype-aware tiling; f32 accumulation in-kernel).
    key, sub = jax.random.split(key)
    x6 = jax.random.normal(sub, (2, 64, 128), dtype=jnp.bfloat16)
    _check(x6, 5, rtol=1e-2, atol=1e-2)

    print("KERNEL_OK")
</pallas_src>

<mosaic_0001>
module attributes {stable_mosaic.version = 11 : i64} {
  func.func @_taps_kernel(%arg0: i32, %arg1: i32, %arg2: memref<2x16x8xf32, #tpu.memory_space<vmem>>, %arg3: memref<2x16x8xf32, #tpu.memory_space<vmem>>, %arg4: memref<2x16x8xf32, #tpu.memory_space<vmem>>) attributes {dimension_semantics = [#tpu.dimension_semantics<parallel>, #tpu.dimension_semantics<parallel>], iteration_bounds = array<i64: 2, 1>, scalar_prefetch = 0 : i64, scratch_operands = 0 : i64, tpu.core_type = #tpu.core_type<tc>, window_params = [{transform_indices = @transform_0, window_bounds = array<i64: 2, 16, 8>}, {transform_indices = @transform_1, window_bounds = array<i64: 2, 16, 8>}, {transform_indices = @transform_2, window_bounds = array<i64: 2, 16, 8>}]} {
    %0 = tpu.iota {dimensions = array<i32: 0>} : vector<16x8xi32>
    %c0 = arith.constant 0 : index
    %c0_0 = arith.constant 0 : index
    %c0_1 = arith.constant 0 : index
    %1 = vector.load %arg2[%c0, %c0_0, %c0_1] : memref<2x16x8xf32, #tpu.memory_space<vmem>>, vector<1x16x8xf32>
    %2 = vector.shape_cast %1 : vector<1x16x8xf32> to vector<16x8xf32>
    %3 = vector.extract_strided_slice %2 {offsets = [0, 0], sizes = [1, 8], strides = [1, 1]} : vector<16x8xf32> to vector<1x8xf32>
    %4 = vector.shape_cast %3 : vector<1x8xf32> to vector<1x8xf32>
    %5 = vector.broadcast %4 : vector<1x8xf32> to vector<16x8xf32>
    %6 = vector.extract_strided_slice %2 {offsets = [15, 0], sizes = [1, 8], strides = [1, 1]} : vector<16x8xf32> to vector<1x8xf32>
    %7 = vector.shape_cast %6 : vector<1x8xf32> to vector<1x8xf32>
    %8 = vector.broadcast %7 : vector<1x8xf32> to vector<16x8xf32>
    %c15_i32 = arith.constant 15 : i32
    %9 = tpu.dynamic_rotate %2 by %c15_i32 dim 0 : vector<16x8xf32>, i32 -> vector<16x8xf32>
    %c15_i32_2 = arith.constant 15 : i32
    %10 = vector.broadcast %c15_i32_2 : i32 to vector<16x8xi32>
    %11 = arith.cmpi sge, %0, %10 : vector<16x8xi32>
    %12 = arith.select %11, %8, %9 : vector<16x8xi1>, vector<16x8xf32>
    %c1_i32 = arith.constant 1 : i32
    %13 = tpu.dynamic_rotate %2 by %c1_i32 dim 0 : vector<16x8xf32>, i32 -> vector<16x8xf32>
    %c1_i32_3 = arith.constant 1 : i32
    %14 = vector.broadcast %c1_i32_3 : i32 to vector<16x8xi32>
    %15 = arith.cmpi slt, %0, %14 : vector<16x8xi32>
    %16 = arith.select %15, %5, %13 : vector<16x8xi1>, vector<16x8xf32>
    %17 = arith.addf %2, %12 : vector<16x8xf32>
    %18 = arith.addf %17, %16 : vector<16x8xf32>
    %c14_i32 = arith.constant 14 : i32
    %19 = tpu.dynamic_rotate %2 by %c14_i32 dim 0 : vector<16x8xf32>, i32 -> vector<16x8xf32>
    %c14_i32_4 = arith.constant 14 : i32
    %20 = vector.broadcast %c14_i32_4 : i32 to vector<16x8xi32>
    %21 = arith.cmpi sge, %0, %20 : vector<16x8xi32>
    %22 = arith.select %21, %8, %19 : vector<16x8xi1>, vector<16x8xf32>
    %c2_i32 = arith.constant 2 : i32
    %23 = tpu.dynamic_rotate %2 by %c2_i32 dim 0 : vector<16x8xf32>, i32 -> vector<16x8xf32>
    %c2_i32_5 = arith.constant 2 : i32
    %24 = vector.broadcast %c2_i32_5 : i32 to vector<16x8xi32>
    %25 = arith.cmpi slt, %0, %24 : vector<16x8xi32>
    %26 = arith.select %25, %5, %23 : vector<16x8xi1>, vector<16x8xf32>
    %27 = arith.addf %18, %22 : vector<16x8xf32>
    %28 = arith.addf %27, %26 : vector<16x8xf32>
    %cst = arith.constant 2.000000e-01 : f32
    %29 = vector.broadcast %cst : f32 to vector<16x8xf32>
    %30 = arith.mulf %28, %29 : vector<16x8xf32>
    %c0_6 = arith.constant 0 : index
    %c0_7 = arith.constant 0 : index
    %c0_8 = arith.constant 0 : index
    %31 = vector.load %arg4[%c0_6, %c0_7, %c0_8] : memref<2x16x8xf32, #tpu.memory_space<vmem>>, vector<1x16x8xf32>
    %32 = vector.shape_cast %31 : vector<1x16x8xf32> to vector<16x8xf32>
    %33 = vector.shape_cast %30 : vector<16x8xf32> to vector<1x16x8xf32>
    tpu.vector_store %arg4[%c0_6, %c0_7, %c0_8], %33 {strides = array<i32>} : memref<2x16x8xf32, #tpu.memory_space<vmem>>, vector<1x16x8xf32>,
    %34 = arith.subf %2, %30 : vector<16x8xf32>
    %c0_9 = arith.constant 0 : index
    %c0_10 = arith.constant 0 : index
    %c0_11 = arith.constant 0 : index
    %35 = vector.load %arg3[%c0_9, %c0_10, %c0_11] : memref<2x16x8xf32, #tpu.memory_space<vmem>>, vector<1x16x8xf32>
    %36 = vector.shape_cast %35 : vector<1x16x8xf32> to vector<16x8xf32>
    %37 = vector.shape_cast %34 : vector<16x8xf32> to vector<1x16x8xf32>
    tpu.vector_store %arg3[%c0_9, %c0_10, %c0_11], %37 {strides = array<i32>} : memref<2x16x8xf32, #tpu.memory_space<vmem>>, vector<1x16x8xf32>,
    %c1 = arith.constant 1 : index
    %c0_12 = arith.constant 0 : index
    %c0_13 = arith.constant 0 : index
    %38 = vector.load %arg2[%c1, %c0_12, %c0_13] : memref<2x16x8xf32, #tpu.memory_space<vmem>>, vector<1x16x8xf32>
    %39 = vector.shape_cast %38 : vector<1x16x8xf32> to vector<16x8xf32>
    %40 = vector.extract_strided_slice %39 {offsets = [0, 0], sizes = [1, 8], strides = [1, 1]} : vector<16x8xf32> to vector<1x8xf32>
    %41 = vector.shape_cast %40 : vector<1x8xf32> to vector<1x8xf32>
    %42 = vector.broadcast %41 : vector<1x8xf32> to vector<16x8xf32>
    %43 = vector.extract_strided_slice %39 {offsets = [15, 0], sizes = [1, 8], strides = [1, 1]} : vector<16x8xf32> to vector<1x8xf32>
    %44 = vector.shape_cast %43 : vector<1x8xf32> to vector<1x8xf32>
    %45 = vector.broadcast %44 : vector<1x8xf32> to vector<16x8xf32>
    %c15_i32_14 = arith.constant 15 : i32
    %46 = tpu.dynamic_rotate %39 by %c15_i32_14 dim 0 : vector<16x8xf32>, i32 -> vector<16x8xf32>
    %c15_i32_15 = arith.constant 15 : i32
    %47 = vector.broadcast %c15_i32_15 : i32 to vector<16x8xi32>
    %48 = arith.cmpi sge, %0, %47 : vector<16x8xi32>
    %49 = arith.select %48, %45, %46 : vector<16x8xi1>, vector<16x8xf32>
    %c1_i32_16 = arith.constant 1 : i32
    %50 = tpu.dynamic_rotate %39 by %c1_i32_16 dim 0 : vector<16x8xf32>, i32 -> vector<16x8xf32>
    %c1_i32_17 = arith.constant 1 : i32
    %51 = vector.broadcast %c1_i32_17 : i32 to vector<16x8xi32>
    %52 = arith.cmpi slt, %0, %51 : vector<16x8xi32>
    %53 = arith.select %52, %42, %50 : vector<16x8xi1>, vector<16x8xf32>
    %54 = arith.addf %39, %49 : vector<16x8xf32>
    %55 = arith.addf %54, %53 : vector<16x8xf32>
    %c14_i32_18 = arith.constant 14 : i32
    %56 = tpu.dynamic_rotate %39 by %c14_i32_18 dim 0 : vector<16x8xf32>, i32 -> vector<16x8xf32>
    %c14_i32_19 = arith.constant 14 : i32
    %57 = vector.broadcast %c14_i32_19 : i32 to vector<16x8xi32>
    %58 = arith.cmpi sge, %0, %57 : vector<16x8xi32>
    %59 = arith.select %58, %45, %56 : vector<16x8xi1>, vector<16x8xf32>
    %c2_i32_20 = arith.constant 2 : i32
    %60 = tpu.dynamic_rotate %39 by %c2_i32_20 dim 0 : vector<16x8xf32>, i32 -> vector<16x8xf32>
    %c2_i32_21 = arith.constant 2 : i32
    %61 = vector.broadcast %c2_i32_21 : i32 to vector<16x8xi32>
    %62 = arith.cmpi slt, %0, %61 : vector<16x8xi32>
    %63 = arith.select %62, %42, %60 : vector<16x8xi1>, vector<16x8xf32>
    %64 = arith.addf %55, %59 : vector<16x8xf32>
    %65 = arith.addf %64, %63 : vector<16x8xf32>
    %cst_22 = arith.constant 2.000000e-01 : f32
    %66 = vector.broadcast %cst_22 : f32 to vector<16x8xf32>
    %67 = arith.mulf %65, %66 : vector<16x8xf32>
    %c1_23 = arith.constant 1 : index
    %c0_24 = arith.constant 0 : index
    %c0_25 = arith.constant 0 : index
    %68 = vector.load %arg4[%c1_23, %c0_24, %c0_25] : memref<2x16x8xf32, #tpu.memory_space<vmem>>, vector<1x16x8xf32>
    %69 = vector.shape_cast %68 : vector<1x16x8xf32> to vector<16x8xf32>
    %70 = vector.shape_cast %67 : vector<16x8xf32> to vector<1x16x8xf32>
    tpu.vector_store %arg4[%c1_23, %c0_24, %c0_25], %70 {strides = array<i32>} : memref<2x16x8xf32, #tpu.memory_space<vmem>>, vector<1x16x8xf32>,
    %71 = arith.subf %39, %67 : vector<16x8xf32>
    %c1_26 = arith.constant 1 : index
    %c0_27 = arith.constant 0 : index
    %c0_28 = arith.constant 0 : index
    %72 = vector.load %arg3[%c1_26, %c0_27, %c0_28] : memref<2x16x8xf32, #tpu.memory_space<vmem>>, vector<1x16x8xf32>
    %73 = vector.shape_cast %72 : vector<1x16x8xf32> to vector<16x8xf32>
    %74 = vector.shape_cast %71 : vector<16x8xf32> to vector<1x16x8xf32>
    tpu.vector_store %arg3[%c1_26, %c0_27, %c0_28], %74 {strides = array<i32>} : memref<2x16x8xf32, #tpu.memory_space<vmem>>, vector<1x16x8xf32>,
    return
  }
  func.func @transform_0(%arg0: i32, %arg1: i32) -> (i32, i32, i32) {
    %c0_i32 = arith.constant 0 : i32
    %c0_i32_0 = arith.constant 0 : i32
    return %arg0, %c0_i32, %arg1 : i32, i32, i32
  }
  func.func @transform_1(%arg0: i32, %arg1: i32) -> (i32, i32, i32) {
    %c0_i32 = arith.constant 0 : i32
    %c0_i32_0 = arith.constant 0 : i32
    return %arg0, %c0_i32, %arg1 : i32, i32, i32
  }
  func.func @transform_2(%arg0: i32, %arg1: i32) -> (i32, i32, i32) {
    %c0_i32 = arith.constant 0 : i32
    %c0_i32_0 = arith.constant 0 : i32
    return %arg0, %c0_i32, %arg1 : i32, i32, i32
  }
}

</mosaic_0001>

<llo_original>
// kernel: tpu_custom_call.1
$region0: #{tpu_custom_call.1}
  #allocation0 [shape = 'u32[]', space=smem, size = 0x4, offset = 0x4, fixed_abs, tag = 'smem constant byte address 0x4 - core index']
  #allocation1 [shape = 'u32[144,128]{1,0:T(1,128)}', space=vmem, size = 0x12000, scoped, tag = 'internal scratch']
  %s0 = inlined_call_operand.vmem [shape: f32[4,16,8], index: 0, kind: input, shape index: {}]
  %s1 = inlined_call_operand.vmem [shape: f32[4,16,8], index: 1, kind: output, shape index: {0}]
  %s2 = inlined_call_operand.vmem [shape: f32[4,16,8], index: 2, kind: output, shape index: {1}]
  %3 = xla_tuple %s1, %s2
  %s4 = sld [smem:[#allocation0]]
  $region45: #{tpu_custom_call.1} parent=0
    _
  %s6 = ssub.s32 1, %s4
  %s7 = scalar_select 0, %s6, %s4
  loop: start=0, step=1, limit=4
  $region2: #{tpu_custom_call.1} parent=0 // loop_pre_header
    _
  $region3: #{tpu_custom_call.1} parent=0 // loop_header
    %s9 = sphi 0, %s13
    %p10 = scmp.ge.s32.totalorder %s9, 4
    %s16 = sphi 0, %s28
    %s17 = sphi 0, %s24
    %s18 = sphi 0, %s16
    %s19 = sphi 0, %s17
    %s20 = sphi 0, %s18
    %s21 = sphi 0, %s19
    %s33 = sphi 0, %s35
    %s36 = sphi 0, %s33
    %s37 = sphi 0, %s36
    %s53 = sphi 0, %s37
    %s61 = sphi 0, %s63
    %s64 = sphi 0, %s61
    %s65 = sphi 0, %s64
    %s81 = sphi 0, %s65
    %s89 = sphi 0, %s91
    %s92 = sphi 0, %s89
    %s93 = sphi 0, %s92
    %s109 = sphi 0, %s93
  $region4: #{tpu_custom_call.1} parent=0 // loop_header_branch
    %12 = sbr.rel (%p10) target = $region8
  $region5: #{tpu_custom_call.1} parent=0 // loop_body
    %s14 = ssub.s32 %s9, 1
    %s15 = ssub.s32 %s9, 2
    %s22 = sadd.s32 1, %s17
    %p23 = scmp.ge.s32.totalorder %s22, 1
    %s24 = scalar_select %p23, 0, %s22
    %s25 = sadd.s32 1, %s16
    %s26 = scalar_select %p23, %s25, %s16
    %p27 = scmp.ge.s32.totalorder %s26, 2
    %s28 = scalar_select %p27, 0, %s26
    %s29 = ssub.s32 %s16, %s28
    %s30 = ssub.s32 %s17, %s24
    %s31 = sor.u32 %s29, %s30
    %p32 = scmp.eq.s32.totalorder %s31, 0
    %s34 = sadd.s32 %s33, 1
    %s35 = scalar_select %p32, %s33, %s34
    %p38 = pneg %p32
    %p39 = scmp.eq.s32.totalorder %s9, 1
    %p40 = por %p38, %p39
    %p41 = scmp.ne.s32.totalorder %s33, %s36
    %p42 = scmp.eq.s32.totalorder %s9, 0
    %p43 = por %p41, %p42
    %p44 = scmp.ne.s32.totalorder %s33, %s36
    %p45 = scmp.eq.s32.totalorder %s14, 1
    %p46 = por %p44, %p45
    %p47 = scmp.ne.s32.totalorder %s36, %s37
    %p48 = scmp.eq.s32.totalorder %s14, 0
    %p49 = por %p47, %p48
    %p50 = scmp.ne.s32.totalorder %s36, %s37
    %p51 = scmp.eq.s32.totalorder %s15, 1
    %p52 = por %p50, %p51
    %p54 = scmp.ne.s32.totalorder %s37, %s53
    %p55 = scmp.eq.s32.totalorder %s15, 0
    %p56 = por %p54, %p55
    %s57 = ssub.s32 %s16, %s28
    %s58 = ssub.s32 %s17, %s24
    %s59 = sor.u32 %s57, %s58
    %p60 = scmp.eq.s32.totalorder %s59, 0
    %s62 = sadd.s32 %s61, 1
    %s63 = scalar_select %p60, %s61, %s62
    %p66 = pneg %p60
    %p67 = scmp.eq.s32.totalorder %s9, 1
    %p68 = por %p66, %p67
    %p69 = scmp.ne.s32.totalorder %s61, %s64
    %p70 = scmp.eq.s32.totalorder %s9, 0
    %p71 = por %p69, %p70
    %p72 = scmp.ne.s32.totalorder %s61, %s64
    %p73 = scmp.eq.s32.totalorder %s14, 1
    %p74 = por %p72, %p73
    %p75 = scmp.ne.s32.totalorder %s64, %s65
    %p76 = scmp.eq.s32.totalorder %s14, 0
    %p77 = por %p75, %p76
    %p78 = scmp.ne.s32.totalorder %s64, %s65
    %p79 = scmp.eq.s32.totalorder %s15, 1
    %p80 = por %p78, %p79
    %p82 = scmp.ne.s32.totalorder %s65, %s81
    %p83 = scmp.eq.s32.totalorder %s15, 0
    %p84 = por %p82, %p83
    %s85 = ssub.s32 %s16, %s28
    %s86 = ssub.s32 %s17, %s24
    %s87 = sor.u32 %s85, %s86
    %p88 = scmp.eq.s32.totalorder %s87, 0
    %s90 = sadd.s32 %s89, 1
    %s91 = scalar_select %p88, %s89, %s90
    %p94 = pneg %p88
    %p95 = scmp.eq.s32.totalorder %s9, 1
    %p96 = por %p94, %p95
    %p97 = scmp.ne.s32.totalorder %s89, %s92
    %p98 = scmp.eq.s32.totalorder %s9, 0
    %p99 = por %p97, %p98
    %p100 = scmp.ne.s32.totalorder %s89, %s92
    %p101 = scmp.eq.s32.totalorder %s14, 1
    %p102 = por %p100, %p101
    %p103 = scmp.ne.s32.totalorder %s92, %s93
    %p104 = scmp.eq.s32.totalorder %s14, 0
    %p105 = por %p103, %p104
    %p106 = scmp.ne.s32.totalorder %s92, %s93
    %p107 = scmp.eq.s32.totalorder %s15, 1
    %p108 = por %p106, %p107
    %p110 = scmp.ne.s32.totalorder %s93, %s109
    %p111 = scmp.eq.s32.totalorder %s15, 0
    %p112 = por %p110, %p111
    %p113 = scmp.le.s32.totalorder 1, %s9
    %p114 = scmp.lt.s32.totalorder %s9, 3
    %p115 = pnand %p113, %p114
    %p116 = pneg %p115
    // Predicated region
    $region9: #{tpu_custom_call.1} parent=5 // pred_check
      _
    $region10: #{tpu_custom_call.1} parent=5 // pred_check_branch
      %118 = sbr.rel (%p115) target = $region12
    $region11: #{tpu_custom_call.1} parent=5 // pred_region
      %s119 = ssub.s32 %s9, 1
    $region12: #{tpu_custom_call.1} parent=5 // pred_fallthru
      _
    %p120 = scmp.lt.s32.totalorder %s9, 2
    // Predicated region
    $region13: #{tpu_custom_call.1} parent=5 // pred_check
      %p121 = pneg %p120
    $region14: #{tpu_custom_call.1} parent=5 // pred_check_branch
      %123 = sbr.rel (%p121) target = $region16
    $region15: #{tpu_custom_call.1} parent=5 // pred_region
      // Predicated region
      $region17: #{tpu_custom_call.1} parent=15 // pred_check
        %p124 = pneg %p43
      $region18: #{tpu_custom_call.1} parent=15 // pred_check_branch
        %126 = sbr.rel (%p124) target = $region20
      $region19: #{tpu_custom_call.1} parent=15 // pred_region
        %s127 = smul.u32 2, %s16
        %p128 = scmp.lt.s32.totalorder %s127, 3
        %s129 = scalar_select %p128, %s127, 3
        %p130 = scmp.lt.s32.totalorder %s17, 0
        %s131 = scalar_select %p130, %s17, 0
        %s132 = smul.addr %s129, 2
        %s133 = sadd.s32 %s131, %s132
        %s134 = smul.addr %s133, 8
        %s135 = scalar_lea.vmem %s0, %s134
        %s136 = smul.u32 2, %s16
      $region20: #{tpu_custom_call.1} parent=15 // pred_fallthru
        _
    $region16: #{tpu_custom_call.1} parent=5 // pred_fallthru
      _
    %p137 = scmp.le.s32.totalorder 1, %s9
    %p138 = scmp.lt.s32.totalorder %s9, 3
    %p139 = pnand %p137, %p138
    %p140 = pneg %p139
    // Predicated region
    $region21: #{tpu_custom_call.1} parent=5 // pred_check
      _
    $region22: #{tpu_custom_call.1} parent=5 // pred_check_branch
      %142 = sbr.rel (%p139) target = $region24
    $region23: #{tpu_custom_call.1} parent=5 // pred_region
      %s143 = ssub.s32 %s9, 1
      %s144 = smul.u32 2, %s18
      %p145 = scmp.lt.s32.totalorder %s144, 3
      %s146 = scalar_select %p145, %s144, 3
      %p147 = scmp.lt.s32.totalorder %s19, 0
      %s148 = scalar_select %p147, %s19, 0
      %s149 = smul.addr %s146, 2
      %s150 = sadd.s32 %s148, %s149
      %s151 = smul.addr %s150, 8
      %s152 = scalar_lea.vmem %s0, %s151
      %p153 = pneg %p49
      %p154 = pneg %p46
      %p155 = pneg %p77
      %p156 = pneg %p74
      %s157 = smul.u32 2, %s18
      %p158 = scmp.lt.s32.totalorder %s157, 3
      %s159 = scalar_select %p158, %s157, 3
      %p160 = scmp.lt.s32.totalorder %s19, 0
      %s161 = scalar_select %p160, %s19, 0
      %s162 = smul.addr %s159, 2
      %s163 = sadd.s32 %s161, %s162
      %s164 = smul.addr %s163, 8
      %s165 = scalar_lea.vmem %s1, %s164
      %p166 = pneg %p105
      %p167 = pneg %p102
      %s168 = smul.u32 2, %s18
      %p169 = scmp.lt.s32.totalorder %s168, 3
      %s170 = scalar_select %p169, %s168, 3
      %p171 = scmp.lt.s32.totalorder %s19, 0
      %s172 = scalar_select %p171, %s19, 0
      %s173 = smul.addr %s170, 2
      %s174 = sadd.s32 %s172, %s173
      %s175 = smul.addr %s174, 8
      %s176 = scalar_lea.vmem %s2, %s175
      %s177 = smul.u32 2, %s18
      %p178 = scmp.lt.s32.totalorder %s177, 3
      %s179 = scalar_select %p178, %s177, 3
      %p180 = scmp.lt.s32.totalorder %s19, 0
      %s181 = scalar_select %p180, %s19, 0
      %s182 = smul.addr %s179, 2
      %s183 = sadd.s32 %s181, %s182
      %s184 = smul.addr %s183, 8
      %s185 = scalar_lea.vmem %s0, %s184
      %s186 = smul.u32 2, %s18
      %s187 = smul.u32 2, %s18
      %p188 = scmp.lt.s32.totalorder %s187, 3
      %s189 = scalar_select %p188, %s187, 3
      %p190 = scmp.lt.s32.totalorder %s19, 0
      %s191 = scalar_select %p190, %s19, 0
      %s192 = smul.addr %s189, 2
      %s193 = sadd.s32 %s191, %s192
      %s194 = smul.addr %s193, 8
      %s195 = scalar_lea.vmem %s1, %s194
      %s196 = smul.u32 2, %s18
      %s197 = smul.u32 2, %s18
      %p198 = scmp.lt.s32.totalorder %s197, 3
      %s199 = scalar_select %p198, %s197, 3
      %p200 = scmp.lt.s32.totalorder %s19, 0
      %s201 = scalar_select %p200, %s19, 0
      %s202 = smul.addr %s199, 2
      %s203 = sadd.s32 %s201, %s202
      %s204 = smul.addr %s203, 8
      %s205 = scalar_lea.vmem %s2, %s204
      %s206 = smul.u32 2, %s18
      %v207 = vlaneseq
      %v208 = vshrl.u32 %v207, 7
      %v209 = vadd.s32 %v208, 8
      %v210 = vld [vmem:[%s185] sm:$0xff]
      %v211 = vld [vmem:[%s185 + $0x8] sm:$0xff]
      %v212 = vlaneseq
      %v213 = vshrl.u32 %v212, 7
      %v214 = vsub.s32 0, %v213
      %v215 = vrot.slane %v210, %v214
      %v216 = vlaneseq
      %v217 = vshrl.u32 %v216, 7
      %v218 = vsub.s32 7, %v217
      %v219 = vrot.slane %v211, %v218
      %v220 = vrot.slane %v210, 1
      %v221 = vrot.slane %v211, 1
      %vm222 = vcmp.lt.s32.totalorder %v208, 7
      %v223 = vsel %vm222, %v220, %v221
      %v224 = vsel %vm222, %v221, %v220
      %vm225 = vcmp.ge.s32.totalorder %v208, 15
      %vm226 = vcmp.ge.s32.totalorder %v209, 15
      %v227 = vsel %vm225, %v219, %v223
      %v228 = vsel %vm226, %v219, %v224
      %v229 = vrot.slane %v210, 7
      %v230 = vrot.slane %v211, 7
      %vm231 = vcmp.lt.s32.totalorder %v208, 1
      %v232 = vsel %vm231, %v229, %v230
      %v233 = vsel %vm231, %v230, %v229
      %vm234 = vcmp.lt.s32.totalorder %v209, 1
      %v235 = vsel %vm231, %v215, %v233
      %v236 = vsel %vm234, %v215, %v232
      %v237 = vadd.f32 %v210, %v227
      %v238 = vadd.f32 %v211, %v228
      %v239 = vadd.f32 %v237, %v235
      %v240 = vadd.f32 %v238, %v236
      %v241 = vrot.slane %v210, 2
      %v242 = vrot.slane %v211, 2
      %vm243 = vcmp.lt.s32.totalorder %v208, 6
      %v244 = vsel %vm243, %v241, %v242
      %v245 = vsel %vm243, %v242, %v241
      %vm246 = vcmp.ge.s32.totalorder %v208, 14
      %vm247 = vcmp.ge.s32.totalorder %v209, 14
      %v248 = vsel %vm246, %v219, %v244
      %v249 = vsel %vm247, %v219, %v245
      %v250 = vrot.slane %v210, 6
      %v251 = vrot.slane %v211, 6
      %vm252 = vcmp.lt.s32.totalorder %v208, 2
      %v253 = vsel %vm252, %v250, %v251
      %v254 = vsel %vm252, %v251, %v250
      %vm255 = vcmp.lt.s32.totalorder %v209, 2
      %v256 = vsel %vm252, %v215, %v254
      %v257 = vsel %vm255, %v215, %v253
      %v258 = vadd.f32 %v239, %v248
      %v259 = vadd.f32 %v240, %v249
      %v260 = vadd.f32 %v258, %v256
      %v261 = vadd.f32 %v259, %v257
      %v262 = vmul.f32 %v260, 0.2
      %v263 = vmul.f32 %v261, 0.2
      %vm264 = vcmask 64512
      %265 = vst.msk [vmem:[%s205] sm:$0xff] %vm264, %v262
      %266 = vst.msk [vmem:[%s205 + $0x8] sm:$0xff] %vm264, %v263
      %v267 = vsub.f32 %v210, %v262
      %v268 = vsub.f32 %v211, %v263
      %269 = vst.msk [vmem:[%s195] sm:$0xff] %vm264, %v267
      %270 = vst.msk [vmem:[%s195 + $0x8] sm:$0xff] %vm264, %v268
      %s271 = scalar_lea.vmem %s185, 16
      %v272 = vld [vmem:[%s271] sm:$0xff]
      %v273 = vld [vmem:[%s271 + $0x8] sm:$0xff]
      %v274 = vlaneseq
      %v275 = vshrl.u32 %v274, 7
      %v276 = vsub.s32 0, %v275
      %v277 = vrot.slane %v272, %v276
      %v278 = vlaneseq
      %v279 = vshrl.u32 %v278, 7
      %v280 = vsub.s32 7, %v279
      %v281 = vrot.slane %v273, %v280
      %v282 = vrot.slane %v272, 1
      %v283 = vrot.slane %v273, 1
      %v284 = vsel %vm222, %v282, %v283
      %v285 = vsel %vm222, %v283, %v282
      %v286 = vsel %vm225, %v281, %v284
      %v287 = vsel %vm226, %v281, %v285
      %v288 = vrot.slane %v272, 7
      %v289 = vrot.slane %v273, 7
      %v290 = vsel %vm231, %v288, %v289
      %v291 = vsel %vm231, %v289, %v288
      %v292 = vsel %vm231, %v277, %v291
      %v293 = vsel %vm234, %v277, %v290
      %v294 = vadd.f32 %v272, %v286
      %v295 = vadd.f32 %v273, %v287
      %v296 = vadd.f32 %v294, %v292
      %v297 = vadd.f32 %v295, %v293
      %v298 = vrot.slane %v272, 2
      %v299 = vrot.slane %v273, 2
      %v300 = vsel %vm243, %v298, %v299
      %v301 = vsel %vm243, %v299, %v298
      %v302 = vsel %vm246, %v281, %v300
      %v303 = vsel %vm247, %v281, %v301
      %v304 = vrot.slane %v272, 6
      %v305 = vrot.slane %v273, 6
      %v306 = vsel %vm252, %v304, %v305
      %v307 = vsel %vm252, %v305, %v304
      %v308 = vsel %vm252, %v277, %v307
      %v309 = vsel %vm255, %v277, %v306
      %v310 = vadd.f32 %v296, %v302
      %v311 = vadd.f32 %v297, %v303
      %v312 = vadd.f32 %v310, %v308
      %v313 = vadd.f32 %v311, %v309
      %v314 = vmul.f32 %v312, 0.2
      %v315 = vmul.f32 %v313, 0.2
      %s316 = scalar_lea.vmem %s205, 16
      %317 = vst.msk [vmem:[%s316] sm:$0xff] %vm264, %v314
      %318 = vst.msk [vmem:[%s316 + $0x8] sm:$0xff] %vm264, %v315
      %v319 = vsub.f32 %v272, %v314
      %v320 = vsub.f32 %v273, %v315
      %s321 = scalar_lea.vmem %s195, 16
      %322 = vst.msk [vmem:[%s321] sm:$0xff] %vm264, %v319
      %323 = vst.msk [vmem:[%s321 + $0x8] sm:$0xff] %vm264, %v320
      %s324 = smul.u32 2, %s18
      %p325 = scmp.lt.s32.totalorder %s324, 3
      %s326 = scalar_select %p325, %s324, 3
      %p327 = scmp.lt.s32.totalorder %s19, 0
      %s328 = scalar_select %p327, %s19, 0
      %s329 = smul.addr %s326, 2
      %s330 = sadd.s32 %s328, %s329
      %s331 = smul.addr %s330, 8
      %s332 = scalar_lea.vmem %s1, %s331
      %s333 = smul.u32 2, %s18
      %p334 = scmp.lt.s32.totalorder %s333, 3
      %s335 = scalar_select %p334, %s333, 3
      %p336 = scmp.lt.s32.totalorder %s19, 0
      %s337 = scalar_select %p336, %s19, 0
      %s338 = smul.addr %s335, 2
      %s339 = sadd.s32 %s337, %s338
      %s340 = smul.addr %s339, 8
      %s341 = scalar_lea.vmem %s2, %s340
      // Predicated region
      $region25: #{tpu_custom_call.1} parent=23 // pred_check
        %p342 = pneg %p74
      $region26: #{tpu_custom_call.1} parent=23 // pred_check_branch
        %344 = sbr.rel (%p342) target = $region28
      $region27: #{tpu_custom_call.1} parent=23 // pred_region
        %s345 = smul.u32 2, %s18
      $region28: #{tpu_custom_call.1} parent=23 // pred_fallthru
        _
      // Predicated region
      $region29: #{tpu_custom_call.1} parent=23 // pred_check
        %p346 = pneg %p102
      $region30: #{tpu_custom_call.1} parent=23 // pred_check_branch
        %348 = sbr.rel (%p346) target = $region32
      $region31: #{tpu_custom_call.1} parent=23 // pred_region
        %s349 = smul.u32 2, %s18
      $region32: #{tpu_custom_call.1} parent=23 // pred_fallthru
        _
    $region24: #{tpu_custom_call.1} parent=5 // pred_fallthru
      _
    %p350 = scmp.le.s32.totalorder 2, %s9
    // Predicated region
    $region33: #{tpu_custom_call.1} parent=5 // pred_check
      %p351 = pneg %p350
    $region34: #{tpu_custom_call.1} parent=5 // pred_check_branch
      %353 = sbr.rel (%p351) target = $region36
    $region35: #{tpu_custom_call.1} parent=5 // pred_region
      %s354 = ssub.s32 %s9, 2
      // Predicated region
      $region37: #{tpu_custom_call.1} parent=35 // pred_check
        %p355 = pneg %p80
      $region38: #{tpu_custom_call.1} parent=35 // pred_check_branch
        %357 = sbr.rel (%p355) target = $region40
      $region39: #{tpu_custom_call.1} parent=35 // pred_region
        %s358 = smul.u32 2, %s20
        %p359 = scmp.lt.s32.totalorder %s358, 3
        %s360 = scalar_select %p359, %s358, 3
        %p361 = scmp.lt.s32.totalorder %s21, 0
        %s362 = scalar_select %p361, %s21, 0
        %s363 = smul.addr %s360, 2
        %s364 = sadd.s32 %s362, %s363
        %s365 = smul.addr %s364, 8
        %s366 = scalar_lea.vmem %s1, %s365
      $region40: #{tpu_custom_call.1} parent=35 // pred_fallthru
        _
      // Predicated region
      $region41: #{tpu_custom_call.1} parent=35 // pred_check
        %p367 = pneg %p108
      $region42: #{tpu_custom_call.1} parent=35 // pred_check_branch
        %369 = sbr.rel (%p367) target = $region44
      $region43: #{tpu_custom_call.1} parent=35 // pred_region
        %s370 = smul.u32 2, %s20
        %p371 = scmp.lt.s32.totalorder %s370, 3
        %s372 = scalar_select %p371, %s370, 3
        %p373 = scmp.lt.s32.totalorder %s21, 0
        %s374 = scalar_select %p373, %s21, 0
        %s375 = smul.addr %s372, 2
        %s376 = sadd.s32 %s374, %s375
        %s377 = smul.addr %s376, 8
        %s378 = scalar_lea.vmem %s2, %s377
      $region44: #{tpu_custom_call.1} parent=35 // pred_fallthru
        _
    $region36: #{tpu_custom_call.1} parent=5 // pred_fallthru
      _
  $region6: #{tpu_custom_call.1} parent=0 // loop_footer
    %s13 = sadd.s32 1, %s9
  $region7: #{tpu_custom_call.1} parent=0 // loop_footer_branch
    %8 = sbr.rel target = $region3
  $region8: #{tpu_custom_call.1} parent=0 // loop_exit
    _

</llo_original>
